<compile_context>
chip_gen: v7x
topology: tpu7x:2x2x1
jax: 0.10.0
libtpu: 0.0.40
codegen_flags: <defaults>
</compile_context>

<pallas_src>
import math

import jax
import jax.numpy as jnp
from jax.experimental import pallas as pl
from jax.experimental.pallas import tpu as pltpu


def affine_kernel(x_ref, alpha_ref, beta_ref, o_ref):
    # x_ref: (TM, L) row tile; alpha/beta: (1, L), broadcast along rows.
    # Per vreg this is 1 vld + <=2 VALU + 1 vst — no VLIW slot ever binds, so
    # all tuning lives on the DMA / block-size side, not in this body.
    o_ref[...] = x_ref[...] * alpha_ref[...] + beta_ref[...]


def _vmem_capacity_bytes():
    """Physical VMEM per TensorCore; conservative 64 MiB if the query fails."""
    try:
        info = pltpu.get_tpu_info()
        cap = getattr(info, "vmem_capacity_bytes", None)
        if cap:
            return int(cap)
    except Exception:
        pass
    return 64 * 1024 * 1024


def _block_budget():
    """(target_block_bytes, vmem_limit_bytes), sized per chip generation."""
    cap = _vmem_capacity_bytes()
    if cap >= 96 * 1024 * 1024:
        # v5e / v6e class: 128 MiB physical VMEM -> big blocks amortize the
        # ~0.35 us per-grid-step overhead.
        target_block = 8 * 1024 * 1024
    else:
        # v7x class: 64 MiB per TC -> keep the 2x(in+out) double-buffer
        # footprint at ~24 MiB so 2-deep pipelining stays intact.
        target_block = 6 * 1024 * 1024
    # Default 2-deep pipelining keeps 2 input + 2 output buffers resident
    # (~4x block) plus tiny alpha/beta; give that explicit headroom but never
    # claim more than half of physical VMEM.
    vmem_limit = min(cap // 2, 4 * target_block + (8 << 20))
    return target_block, vmem_limit


def _lane_dense_layout(tokens, D):
    """Pick (rows, L, reps, pad_tokens) with L a multiple of 128."""
    if D % 128 == 0:
        return tokens, D, 1, 0
    k = 128 // math.gcd(D, 128)   # smallest k with (k*D) % 128 == 0
    pad = (-tokens) % k           # pad token rows so they fold evenly
    return (tokens + pad) // k, D * k, k, pad


def _choose_tm(rows, L, dtype_bytes, target_block_bytes):
    """Largest row tile (multiple of 8) with block size <= target."""
    tm = max(8, target_block_bytes // (L * dtype_bytes))
    tm = (tm // 8) * 8
    if tm >= rows:
        return rows               # one block spanning all rows (always legal)
    return max(8, tm)


def _even_steps(rows, tm):
    """Nudge tm so the grid-step count is even (balances v7x's two TCs)."""
    if tm >= rows:
        return tm
    steps = -(-rows // tm)
    if steps % 2 == 0:
        return tm
    # Shrink tm by at most 2x (in multiples of 8) looking for an even count;
    # bigger blocks matter more than perfect balance, so don't go further.
    cand = tm - 8
    floor = max(8, tm // 2)
    while cand >= floor:
        if (-(-rows // cand)) % 2 == 0:
            return cand
        cand -= 8
    return tm


def affine_transform(x, alpha, beta):
    """y = alpha * x + beta with alpha/beta of shape (1, 1, D)."""
    B, N, D = x.shape
    assert alpha.shape == (1, 1, D) and beta.shape == (1, 1, D)
    dtype = x.dtype
    dtype_bytes = jnp.dtype(dtype).itemsize
    tokens = B * N

    rows, L, reps, pad = _lane_dense_layout(tokens, D)

    # Lane-dense 2D view; pad a handful of token rows (sliced off below) so
    # the output last dim is always a multiple of 128 -> fully unmasked vst.
    x2 = x.reshape(tokens, D)
    if pad:
        x2 = jnp.pad(x2, ((0, pad), (0, 0)))
    x2 = x2.reshape(rows, L)

    # NOTE: alpha/beta are cast to x.dtype before the multiply; with bf16
    # activations this rounds the float32 parameters first — a negligible
    # deviation from a float32-promoting PyTorch forward (exact for f32).
    a2 = jnp.tile(alpha.reshape(1, D).astype(dtype), (1, reps))
    b2 = jnp.tile(beta.reshape(1, D).astype(dtype), (1, reps))

    target_block, vmem_limit = _block_budget()
    tm = _choose_tm(rows, L, dtype_bytes, target_block)
    tm = _even_steps(rows, tm)
    grid = (pl.cdiv(rows, tm),)

    out2 = pl.pallas_call(
        affine_kernel,
        out_shape=jax.ShapeDtypeStruct((rows, L), dtype),
        grid=grid,
        in_specs=[
            pl.BlockSpec((tm, L), lambda i: (i, 0)),
            # Constant index_map -> alpha/beta stay VMEM-resident, no re-DMA.
            pl.BlockSpec((1, L), lambda i: (0, 0)),
            pl.BlockSpec((1, L), lambda i: (0, 0)),
        ],
        out_specs=pl.BlockSpec((tm, L), lambda i: (i, 0)),
        compiler_params=pltpu.CompilerParams(
            dimension_semantics=("parallel",),
            vmem_limit_bytes=vmem_limit,
        ),
        cost_estimate=pl.CostEstimate(
            flops=2 * B * N * D,
            transcendentals=0,
            bytes_accessed=2 * B * N * D * dtype_bytes + 2 * D * dtype_bytes,
        ),
    )(x2, a2, b2)

    out = out2.reshape(rows * L // D, D)
    if pad:
        out = out[:tokens]
    return out.reshape(B, N, D)


if __name__ == "__main__":
    key = jax.random.PRNGKey(0)
    kx, ka, kb, kx2 = jax.random.split(key, 4)

    # Small shapes consistent with the module: batch=2, tokens=8, features=32.
    B, N, D = 2, 8, 32
    x = jax.random.normal(kx, (B, N, D), dtype=jnp.float32)

    # nn.Parameter(ones)/(zeros) init, perturbed slightly so the affine is
    # non-trivial but deterministic.
    alpha = jnp.ones((1, 1, D), dtype=jnp.float32) + 0.1 * jax.random.normal(
        ka, (1, 1, D), dtype=jnp.float32
    )
    beta = jnp.zeros((1, 1, D), dtype=jnp.float32) + 0.1 * jax.random.normal(
        kb, (1, 1, D), dtype=jnp.float32
    )

    y = affine_transform(x, alpha, beta)
    jax.block_until_ready(y)
    y_ref = alpha * x + beta
    assert y.shape == (B, N, D)
    assert jnp.allclose(y, y_ref, atol=1e-6, rtol=1e-6)

    # Also exercise the token-padding path (tokens not divisible by the fold
    # factor k = 128/gcd(32,128) = 4): N=7 -> 14 tokens, 2 padded rows.
    x_odd = jax.random.normal(kx2, (B, 7, D), dtype=jnp.float32)
    y_odd = affine_transform(x_odd, alpha, beta)
    jax.block_until_ready(y_odd)
    assert y_odd.shape == (B, 7, D)
    assert jnp.allclose(y_odd, alpha * x_odd + beta, atol=1e-6, rtol=1e-6)

    print("KERNEL_OK")
</pallas_src>

<mosaic_0001>
module attributes {stable_mosaic.version = 11 : i64} {
  func.func @affine_kernel(%arg0: i32, %arg1: memref<4x128xf32, #tpu.memory_space<vmem>>, %arg2: memref<1x128xf32, #tpu.memory_space<vmem>>, %arg3: memref<1x128xf32, #tpu.memory_space<vmem>>, %arg4: memref<4x128xf32, #tpu.memory_space<vmem>>) attributes {dimension_semantics = [#tpu.dimension_semantics<parallel>], iteration_bounds = array<i64: 1>, scalar_prefetch = 0 : i64, scratch_operands = 0 : i64, tpu.core_type = #tpu.core_type<tc>, window_params = [{transform_indices = @transform_0, window_bounds = array<i64: 4, 128>}, {pipeline_mode = #tpu.pipeline_mode<synchronous>, transform_indices = @transform_1, window_bounds = array<i64: 1, 128>}, {pipeline_mode = #tpu.pipeline_mode<synchronous>, transform_indices = @transform_2, window_bounds = array<i64: 1, 128>}, {transform_indices = @transform_3, window_bounds = array<i64: 4, 128>}]} {
    %c0 = arith.constant 0 : index
    %c0_0 = arith.constant 0 : index
    %0 = vector.load %arg1[%c0, %c0_0] : memref<4x128xf32, #tpu.memory_space<vmem>>, vector<4x128xf32>
    %c0_1 = arith.constant 0 : index
    %c0_2 = arith.constant 0 : index
    %1 = vector.load %arg2[%c0_1, %c0_2] : memref<1x128xf32, #tpu.memory_space<vmem>>, vector<1x128xf32>
    %2 = vector.broadcast %1 : vector<1x128xf32> to vector<4x128xf32>
    %3 = arith.mulf %0, %2 : vector<4x128xf32>
    %c0_3 = arith.constant 0 : index
    %c0_4 = arith.constant 0 : index
    %4 = vector.load %arg3[%c0_3, %c0_4] : memref<1x128xf32, #tpu.memory_space<vmem>>, vector<1x128xf32>
    %5 = vector.broadcast %4 : vector<1x128xf32> to vector<4x128xf32>
    %6 = arith.addf %3, %5 : vector<4x128xf32>
    %c0_5 = arith.constant 0 : index
    %c0_6 = arith.constant 0 : index
    %7 = vector.load %arg4[%c0_5, %c0_6] : memref<4x128xf32, #tpu.memory_space<vmem>>, vector<4x128xf32>
    tpu.vector_store %arg4[%c0_5, %c0_6], %6 {strides = array<i32>} : memref<4x128xf32, #tpu.memory_space<vmem>>, vector<4x128xf32>,
    return
  }
  func.func @transform_0(%arg0: i32) -> (i32, i32) {
    %c0_i32 = arith.constant 0 : i32
    %c0_i32_0 = arith.constant 0 : i32
    return %arg0, %c0_i32 : i32, i32
  }
  func.func @transform_1(%arg0: i32) -> (i32, i32) {
    %c0_i32 = arith.constant 0 : i32
    %c0_i32_0 = arith.constant 0 : i32
    %c0_i32_1 = arith.constant 0 : i32
    return %c0_i32, %c0_i32_0 : i32, i32
  }
  func.func @transform_2(%arg0: i32) -> (i32, i32) {
    %c0_i32 = arith.constant 0 : i32
    %c0_i32_0 = arith.constant 0 : i32
    %c0_i32_1 = arith.constant 0 : i32
    return %c0_i32, %c0_i32_0 : i32, i32
  }
  func.func @transform_3(%arg0: i32) -> (i32, i32) {
    %c0_i32 = arith.constant 0 : i32
    %c0_i32_0 = arith.constant 0 : i32
    return %arg0, %c0_i32 : i32, i32
  }
}

</mosaic_0001>

<llo_original>
// kernel: tpu_custom_call.1
$region0: #{tpu_custom_call.1}
  #allocation0 [shape = 'u32[]', space=smem, size = 0x4, offset = 0x4, fixed_abs, tag = 'smem constant byte address 0x4 - core index']
  #allocation1 [shape = 'u32[144,128]{1,0:T(1,128)}', space=vmem, size = 0x12000, scoped, tag = 'internal scratch']
  %s0 = inlined_call_operand.hbm [shape: f32[4,128], index: 0, kind: input, shape index: {}]
  %s1 = inlined_call_operand.vmem [shape: f32[1,128], index: 1, kind: input, shape index: {}]
  %s2 = inlined_call_operand.vmem [shape: f32[1,128], index: 2, kind: input, shape index: {}]
  %s3 = inlined_call_operand.hbm [shape: f32[4,128], index: 3, kind: output, shape index: {}]
  %s4 = sld [smem:[#allocation0]]
  $region26: #{tpu_custom_call.1} parent=0
    _
  %s6 = ssub.s32 1, %s4
  %s7 = scalar_select 0, %s6, %s4
  $region1: #{tpu_custom_call.1} parent=0
    #allocation2 [shape = 'u8[2048]{0}', space=vmem, size = 0x800, scoped, tag = 'input window, operand 0, single buffered']
    #allocation3 [shape = 's32[1]{0}', space=sflag, size = 0x4, scoped, tag = 'scoped memory for tpu_custom_call.1']
    #allocation4 [shape = 's32[1]{0}', space=sflag, size = 0x4, scoped, tag = 'scoped memory for tpu_custom_call.1']
    #allocation5 [shape = 'u8[2048]{0}', space=vmem, size = 0x800, scoped, tag = 'output window, operand 0, single buffered']
    %8 = vsyncpa [#allocation3], 0
    %9 = vsyncpa [#allocation4], 0
    // Predicated region
    $region2: #{tpu_custom_call.1} parent=1 // pred_check
      _
    $region3: #{tpu_custom_call.1} parent=1 // pred_check_branch
      %11 = sbr.rel (0) target = $region5
    $region4: #{tpu_custom_call.1} parent=1 // pred_region
      %s13 = ssub.s32 64, 64
      %14 = vsyncadd [#allocation3], %s13
      %s16 = sshll.u32 [#allocation2], 4
      %s17 = int_to_ptr.vmem [resolvable:$true] %s16
      %19 = dma.hbm_to_vmem [thread:$0]  %s0, 64, %s17, [#allocation3]
    $region5: #{tpu_custom_call.1} parent=1 // pred_fallthru
      _
    // Predicated region
    $region6: #{tpu_custom_call.1} parent=1 // pred_check
      _
    $region7: #{tpu_custom_call.1} parent=1 // pred_check_branch
      %21 = sbr.rel (0) target = $region9
    $region8: #{tpu_custom_call.1} parent=1 // pred_region
      _
    $region9: #{tpu_custom_call.1} parent=1 // pred_fallthru
      _
    // Predicated region
    $region10: #{tpu_custom_call.1} parent=1 // pred_check
      _
    $region11: #{tpu_custom_call.1} parent=1 // pred_check_branch
      %23 = sbr.rel (0) target = $region13
    $region12: #{tpu_custom_call.1} parent=1 // pred_region
      _
    $region13: #{tpu_custom_call.1} parent=1 // pred_fallthru
      _
    // Predicated region
    $region14: #{tpu_custom_call.1} parent=1 // pred_check
      _
    $region15: #{tpu_custom_call.1} parent=1 // pred_check_branch
      %25 = sbr.rel (0) target = $region17
    $region16: #{tpu_custom_call.1} parent=1 // pred_region
      %26 = dma.done [#allocation3], 64
    $region17: #{tpu_custom_call.1} parent=1 // pred_fallthru
      _
    %v27 = vld [vmem:[#allocation2] sm:$0xf]
    %v28 = vld [vmem:[%s1] sm:$0x1]
    %v30 = vlaneseq
    %v31 = vshrl.u32 %v30, 7
    %v32 = vsub.s32 0, %v31
    %v33 = vrot.slane %v28, %v32
    %v35 = vmul.f32 %v27, %v33
    %v36 = vld [vmem:[%s2] sm:$0x1]
    %v38 = vlaneseq
    %v39 = vshrl.u32 %v38, 7
    %v40 = vsub.s32 0, %v39
    %v41 = vrot.slane %v36, %v40
    %v43 = vadd.f32 %v35, %v41
    %44 = vst [vmem:[#allocation5] sm:$0xf] %v43
    // Predicated region
    $region18: #{tpu_custom_call.1} parent=1 // pred_check
      _
    $region19: #{tpu_custom_call.1} parent=1 // pred_check_branch
      %46 = sbr.rel (0) target = $region21
    $region20: #{tpu_custom_call.1} parent=1 // pred_region
      %s48 = ssub.s32 64, 64
      %49 = vsyncadd [#allocation4], %s48
      %s51 = sshll.u32 [#allocation5], 4
      %s52 = int_to_ptr.vmem [resolvable:$true] %s51
      %54 = dma.vmem_to_hbm [thread:$0]  %s52, 64, %s3, [#allocation4]
    $region21: #{tpu_custom_call.1} parent=1 // pred_fallthru
      _
    // Predicated region
    $region22: #{tpu_custom_call.1} parent=1 // pred_check
      _
    $region23: #{tpu_custom_call.1} parent=1 // pred_check_branch
      %56 = sbr.rel (0) target = $region25
    $region24: #{tpu_custom_call.1} parent=1 // pred_region
      %57 = dma.done [#allocation4], 64
    $region25: #{tpu_custom_call.1} parent=1 // pred_fallthru
      _
    %58 = vsyncpa [#allocation3], 1
    %59 = vsyncpa [#allocation4], 1

</llo_original>
